<compile_context>
chip_gen: v7x
topology: tpu7x:2x2x1
jax: 0.10.0
libtpu: 0.0.40
codegen_flags: <defaults>
</compile_context>

<pallas_src>
import jax
import jax.numpy as jnp
from jax.experimental import pallas as pl
from jax.experimental.pallas import tpu as pltpu


def _round_up(v, m):
    return -(-int(v) // int(m)) * int(m)


def _padded_tile_bytes(rows, cols, dtype_bytes):
    # Account for register tiling: (8,128) for 32-bit, (16,128) for bf16, ...
    dtype_bytes = int(dtype_bytes)
    sub = 8 * max(1, 4 // dtype_bytes)
    r = _round_up(max(int(rows), 1), sub)
    c = _round_up(max(int(cols), 1), 128)
    return r * c * dtype_bytes


def _vmem_capacity_bytes():
    try:
        return int(pltpu.get_tpu_info().vmem_capacity_bytes)
    except Exception:
        return 64 << 20   # conservative fallback: v7x has 64 MiB per TensorCore


def mlp_kernel(x_ref, w1_ref, b1_ref, w2_ref, b2_ref,
               w3_ref, b3_ref, w4_ref, b4_ref, o_ref):
    # (Linear + ReLU) x3 on the MXU with f32 accumulation.  Hidden widths
    # (64/32/16) leave MXU columns underfilled on purpose: the kernel is
    # HBM-read bound on x, so MXU slack is free.
    h = jnp.dot(x_ref[...], w1_ref[...], preferred_element_type=jnp.float32)
    h = jnp.maximum(h + b1_ref[...], 0.0)

    h = jnp.dot(h, w2_ref[...], preferred_element_type=jnp.float32)
    h = jnp.maximum(h + b2_ref[...], 0.0)

    h = jnp.dot(h, w3_ref[...], preferred_element_type=jnp.float32)
    h = jnp.maximum(h + b3_ref[...], 0.0)

    # Final layer (K=16, N=1): VPU multiply + XLU lane reduce instead of a
    # wasteful N=1 MXU push.  Result is a [block_b, 1] column of scalars.
    o = jnp.sum(h * w4_ref[...], axis=-1, keepdims=True) + b4_ref[...]

    # Lane-dense store: relayout the per-row scalars from sublanes to lanes so
    # the output tile is a [1, block_b] row (unmasked vst, dense writeback DMA)
    # instead of a 1-lane-wide column of masked vst.msk stores.  The relayout
    # rides the otherwise-idle XLU slot.
    o_ref[...] = o.reshape(o_ref.shape).astype(o_ref.dtype)


def linear_classifier_cpc(x, params, *, block_b=4096, compute_dtype=jnp.bfloat16):
    """x: [B, input_size]. params: dict of w1..w4 ([in,out]) and b1..b4 ([1,out]).

    compute_dtype: dtype for the HBM-heavy operands (x tile and w1).  Default
    bf16 (halves the dominant HBM traffic; f32 accumulation is kept inside the
    kernel, results match f32 to ~1e-2).  Pass jnp.float32 for the
    bit-tolerance path matching the PyTorch module.
    """
    B, in_size = x.shape
    if compute_dtype is None:
        compute_dtype = x.dtype
    compute_dtype = jnp.dtype(compute_dtype)

    w1, b1 = params["w1"], params["b1"]
    w2, b2 = params["w2"], params["b2"]
    w3, b3 = params["w3"], params["b3"]
    w4, b4 = params["w4"], params["b4"]
    # Final layer weight as a lane row (1, 16) for the VPU reduce.
    w4_row = jnp.reshape(w4, (1, w4.shape[0]))

    # Only the HBM-heavy operands are cast; biases / downstream layers stay
    # f32 (accumulator dtype), so v5e's lack of bf16 VPU is irrelevant.
    if compute_dtype != x.dtype:
        x = x.astype(compute_dtype)
    if compute_dtype != w1.dtype:
        w1 = w1.astype(compute_dtype)

    itemsize = compute_dtype.itemsize
    sub = 8 * max(1, 4 // itemsize)       # sublane tile: 8 (f32) / 16 (bf16)

    # --- per-generation VMEM budget -> cap on the batch tile -------------------
    vmem_cap = _vmem_capacity_bytes()     # 128 MiB v5e/v6e, 64 MiB/TC v7x
    budget = int(0.70 * vmem_cap)
    lane_in = _round_up(in_size, 128)
    weights = (w1, b1, w2, b2, w3, b3, w4_row, b4)
    w_bytes = sum(2 * _padded_tile_bytes(t.shape[0], t.shape[1],
                                         jnp.dtype(t.dtype).itemsize)
                  for t in weights)       # resident, double-buffered by default
    fixed = w_bytes + (4 << 20)           # + headroom for internal scratch
    # per batch row: double-buffered x tile + double-buffered out row
    #                + in-kernel hidden activations (128-lane padded, f32)
    per_row = 2 * lane_in * itemsize + 2 * 8 * 4 + 3 * 128 * 4
    max_rows = max(sub, ((budget - fixed) // per_row // sub) * sub)

    # --- batch tile selection (sublane-aligned, tail padded) --------------------
    B_sub = _round_up(B, sub)
    block_b = _round_up(max(int(block_b), sub), sub)
    block_b = min(block_b, B_sub, max_rows)
    # Guarantee >=2 grid steps when possible so the "parallel" batch axis can
    # shard across both TensorCores on v7x (no-op on single-TC v5e/v6e).
    if B_sub >= 2 * sub and pl.cdiv(B_sub, block_b) < 2:
        block_b = _round_up(B_sub // 2, sub)

    num_blocks = pl.cdiv(B, block_b)
    b_pad = num_blocks * block_b
    if b_pad != B:
        x = jnp.pad(x, ((0, b_pad - B), (0, 0)))

    # --- VMEM limit & scheduler cost hint ---------------------------------------
    vmem_need = fixed + per_row * block_b
    vmem_limit = int(min(max(vmem_need + (8 << 20), 32 << 20),
                         int(0.85 * vmem_cap)))

    flops = 2 * b_pad * (in_size * 64 + 64 * 32 + 32 * 16 + 16 * 1)
    bytes_accessed = (b_pad * in_size * itemsize + b_pad * 4
                      + sum(int(t.size) * jnp.dtype(t.dtype).itemsize
                            for t in weights))
    cost = pl.CostEstimate(flops=int(flops), transcendentals=0,
                           bytes_accessed=int(bytes_accessed))

    # Weights/biases are tiny -> full-array blocks, constant index_map (no
    # re-DMA across grid steps).  At these sizes their double-buffered VMEM
    # footprint is negligible, so we skip pipeline_mode=pl.Buffered(1).
    def full_spec(t):
        return pl.BlockSpec(t.shape, lambda i: (0, 0))

    out_pad = pl.pallas_call(
        mlp_kernel,
        out_shape=jax.ShapeDtypeStruct((num_blocks, 1, block_b), jnp.float32),
        grid=(num_blocks,),
        in_specs=[
            pl.BlockSpec((block_b, in_size), lambda i: (i, 0)),   # x tile
            full_spec(w1), full_spec(b1),
            full_spec(w2), full_spec(b2),
            full_spec(w3), full_spec(b3),
            full_spec(w4_row), full_spec(b4),
        ],
        out_specs=pl.BlockSpec((1, 1, block_b), lambda i: (i, 0, 0)),
        compiler_params=pltpu.CompilerParams(
            dimension_semantics=("parallel",),
            vmem_limit_bytes=vmem_limit),
        cost_estimate=cost,
    )(x, w1, b1, w2, b2, w3, b3, w4_row, b4)

    # Lane-dense (num_blocks, 1, block_b) slab -> [B, 1] column (layout
    # plumbing only; outside the kernel).
    return out_pad.reshape(-1)[:B, None]


def init_params(key, input_size):
    """Deterministic init mimicking nn.Linear's uniform(-1/sqrt(in), 1/sqrt(in))."""
    dims = [(input_size, 64), (64, 32), (32, 16), (16, 1)]
    params = {}
    for idx, (fan_in, fan_out) in enumerate(dims, start=1):
        key, kw, kb = jax.random.split(key, 3)
        bound = 1.0 / jnp.sqrt(jnp.float32(fan_in))
        params[f"w{idx}"] = jax.random.uniform(
            kw, (fan_in, fan_out), jnp.float32, minval=-bound, maxval=bound)
        params[f"b{idx}"] = jax.random.uniform(
            kb, (1, fan_out), jnp.float32, minval=-bound, maxval=bound)
    return params


def _reference(x, params):
    h = jnp.maximum(x @ params["w1"] + params["b1"], 0.0)
    h = jnp.maximum(h @ params["w2"] + params["b2"], 0.0)
    h = jnp.maximum(h @ params["w3"] + params["b3"], 0.0)
    return h @ params["w4"] + params["b4"]


if __name__ == "__main__":
    key = jax.random.PRNGKey(0)
    k_x, k_p, k_x2 = jax.random.split(key, 3)

    batch, input_size = 8, 32
    x = jax.random.normal(k_x, (batch, input_size), jnp.float32)
    params = init_params(k_p, input_size)
    ref = _reference(x, params)

    # Case 1: default path (bf16 x/w1, f32 accumulate), single grid step.
    out = jax.block_until_ready(linear_classifier_cpc(x, params))
    assert out.shape == (batch, 1)
    assert jnp.allclose(out, ref, atol=5e-2, rtol=5e-2)

    # Case 2: bit-tolerance f32 path.
    out_f32 = jax.block_until_ready(
        linear_classifier_cpc(x, params, compute_dtype=jnp.float32))
    assert out_f32.shape == (batch, 1)
    assert jnp.allclose(out_f32, ref, atol=1e-5, rtol=1e-5)

    # Case 3: batch not divisible by block_b -> multi-block grid, tail padding,
    # lane-dense output reassembly.
    batch2 = 20
    x2 = jax.random.normal(k_x2, (batch2, input_size), jnp.float32)
    out2 = jax.block_until_ready(
        linear_classifier_cpc(x2, params, block_b=8, compute_dtype=jnp.float32))
    ref2 = _reference(x2, params)
    assert out2.shape == (batch2, 1)
    assert jnp.allclose(out2, ref2, atol=1e-5, rtol=1e-5)

    print("KERNEL_OK")
</pallas_src>

<mosaic_0001>
module attributes {stable_mosaic.version = 11 : i64} {
  func.func @mlp_kernel(%arg0: i32, %arg1: memref<16x32xbf16, #tpu.memory_space<vmem>>, %arg2: memref<32x64xbf16, #tpu.memory_space<vmem>>, %arg3: memref<1x64xf32, #tpu.memory_space<vmem>>, %arg4: memref<64x32xf32, #tpu.memory_space<vmem>>, %arg5: memref<1x32xf32, #tpu.memory_space<vmem>>, %arg6: memref<32x16xf32, #tpu.memory_space<vmem>>, %arg7: memref<1x16xf32, #tpu.memory_space<vmem>>, %arg8: memref<1x16xf32, #tpu.memory_space<vmem>>, %arg9: memref<1x1xf32, #tpu.memory_space<vmem>>, %arg10: memref<1x1x16xf32, #tpu.memory_space<vmem>>) attributes {dimension_semantics = [#tpu.dimension_semantics<parallel>], iteration_bounds = array<i64: 1>, scalar_prefetch = 0 : i64, scratch_operands = 0 : i64, tpu.core_type = #tpu.core_type<tc>, window_params = [{transform_indices = @transform_0, window_bounds = array<i64: 16, 32>}, {pipeline_mode = #tpu.pipeline_mode<synchronous>, transform_indices = @transform_1, window_bounds = array<i64: 32, 64>}, {pipeline_mode = #tpu.pipeline_mode<synchronous>, transform_indices = @transform_2, window_bounds = array<i64: 1, 64>}, {pipeline_mode = #tpu.pipeline_mode<synchronous>, transform_indices = @transform_3, window_bounds = array<i64: 64, 32>}, {pipeline_mode = #tpu.pipeline_mode<synchronous>, transform_indices = @transform_4, window_bounds = array<i64: 1, 32>}, {pipeline_mode = #tpu.pipeline_mode<synchronous>, transform_indices = @transform_5, window_bounds = array<i64: 32, 16>}, {pipeline_mode = #tpu.pipeline_mode<synchronous>, transform_indices = @transform_6, window_bounds = array<i64: 1, 16>}, {pipeline_mode = #tpu.pipeline_mode<synchronous>, transform_indices = @transform_7, window_bounds = array<i64: 1, 16>}, {pipeline_mode = #tpu.pipeline_mode<synchronous>, transform_indices = @transform_8, window_bounds = array<i64: 1, 1>}, {transform_indices = @transform_9, window_bounds = array<i64: 1, 1, 16>}]} {
    %c0 = arith.constant 0 : index
    %c0_0 = arith.constant 0 : index
    %0 = vector.load %arg1[%c0, %c0_0] : memref<16x32xbf16, #tpu.memory_space<vmem>>, vector<16x32xbf16>
    %c0_1 = arith.constant 0 : index
    %c0_2 = arith.constant 0 : index
    %1 = vector.load %arg2[%c0_1, %c0_2] : memref<32x64xbf16, #tpu.memory_space<vmem>>, vector<32x64xbf16>
    %cst = arith.constant dense<0.000000e+00> : vector<16x64xf32>
    %2 = tpu.matmul %0, %1, %cst {dimension_numbers = #tpu.dot_dimension_numbers<[1], [0], [0], [1], [0, 0, 1, 1], [], []>} : vector<16x32xbf16>, vector<32x64xbf16>, vector<16x64xf32> -> vector<16x64xf32>
    %c0_3 = arith.constant 0 : index
    %c0_4 = arith.constant 0 : index
    %3 = vector.load %arg3[%c0_3, %c0_4] : memref<1x64xf32, #tpu.memory_space<vmem>>, vector<1x64xf32>
    %4 = vector.broadcast %3 : vector<1x64xf32> to vector<16x64xf32>
    %5 = arith.addf %2, %4 : vector<16x64xf32>
    %cst_5 = arith.constant 0.000000e+00 : f32
    %6 = vector.broadcast %cst_5 : f32 to vector<16x64xf32>
    %7 = arith.maximumf %5, %6 : vector<16x64xf32>
    %c0_6 = arith.constant 0 : index
    %c0_7 = arith.constant 0 : index
    %8 = vector.load %arg4[%c0_6, %c0_7] : memref<64x32xf32, #tpu.memory_space<vmem>>, vector<64x32xf32>
    %cst_8 = arith.constant dense<0.000000e+00> : vector<16x32xf32>
    %9 = tpu.matmul %7, %8, %cst_8 {dimension_numbers = #tpu.dot_dimension_numbers<[1], [0], [0], [1], [0, 0, 1, 1], [], []>} : vector<16x64xf32>, vector<64x32xf32>, vector<16x32xf32> -> vector<16x32xf32>
    %c0_9 = arith.constant 0 : index
    %c0_10 = arith.constant 0 : index
    %10 = vector.load %arg5[%c0_9, %c0_10] : memref<1x32xf32, #tpu.memory_space<vmem>>, vector<1x32xf32>
    %11 = vector.broadcast %10 : vector<1x32xf32> to vector<16x32xf32>
    %12 = arith.addf %9, %11 : vector<16x32xf32>
    %cst_11 = arith.constant 0.000000e+00 : f32
    %13 = vector.broadcast %cst_11 : f32 to vector<16x32xf32>
    %14 = arith.maximumf %12, %13 : vector<16x32xf32>
    %c0_12 = arith.constant 0 : index
    %c0_13 = arith.constant 0 : index
    %15 = vector.load %arg6[%c0_12, %c0_13] : memref<32x16xf32, #tpu.memory_space<vmem>>, vector<32x16xf32>
    %cst_14 = arith.constant dense<0.000000e+00> : vector<16x16xf32>
    %16 = tpu.matmul %14, %15, %cst_14 {dimension_numbers = #tpu.dot_dimension_numbers<[1], [0], [0], [1], [0, 0, 1, 1], [], []>} : vector<16x32xf32>, vector<32x16xf32>, vector<16x16xf32> -> vector<16x16xf32>
    %c0_15 = arith.constant 0 : index
    %c0_16 = arith.constant 0 : index
    %17 = vector.load %arg7[%c0_15, %c0_16] : memref<1x16xf32, #tpu.memory_space<vmem>>, vector<1x16xf32>
    %18 = vector.broadcast %17 : vector<1x16xf32> to vector<16x16xf32>
    %19 = arith.addf %16, %18 : vector<16x16xf32>
    %cst_17 = arith.constant 0.000000e+00 : f32
    %20 = vector.broadcast %cst_17 : f32 to vector<16x16xf32>
    %21 = arith.maximumf %19, %20 : vector<16x16xf32>
    %c0_18 = arith.constant 0 : index
    %c0_19 = arith.constant 0 : index
    %22 = vector.load %arg8[%c0_18, %c0_19] : memref<1x16xf32, #tpu.memory_space<vmem>>, vector<1x16xf32>
    %23 = vector.broadcast %22 : vector<1x16xf32> to vector<16x16xf32>
    %24 = arith.mulf %21, %23 : vector<16x16xf32>
    %cst_20 = arith.constant dense<0.000000e+00> : vector<16xf32>
    %25 = vector.multi_reduction <add>, %24, %cst_20 [1] : vector<16x16xf32> to vector<16xf32>
    %26 = vector.shape_cast %25 : vector<16xf32> to vector<16x1xf32>
    %c0_21 = arith.constant 0 : index
    %c0_22 = arith.constant 0 : index
    %27 = vector.load %arg9[%c0_21, %c0_22] : memref<1x1xf32, #tpu.memory_space<vmem>>, vector<1x1xf32>
    %28 = vector.broadcast %27 : vector<1x1xf32> to vector<16x1xf32>
    %29 = arith.addf %26, %28 : vector<16x1xf32>
    %30 = vector.shape_cast %29 : vector<16x1xf32> to vector<1x1x16xf32>
    %c0_23 = arith.constant 0 : index
    %c0_24 = arith.constant 0 : index
    %c0_25 = arith.constant 0 : index
    %31 = vector.load %arg10[%c0_23, %c0_24, %c0_25] : memref<1x1x16xf32, #tpu.memory_space<vmem>>, vector<1x1x16xf32>
    tpu.vector_store %arg10[%c0_23, %c0_24, %c0_25], %30 {strides = array<i32>} : memref<1x1x16xf32, #tpu.memory_space<vmem>>, vector<1x1x16xf32>,
    return
  }
  func.func @transform_0(%arg0: i32) -> (i32, i32) {
    %c0_i32 = arith.constant 0 : i32
    %c0_i32_0 = arith.constant 0 : i32
    return %arg0, %c0_i32 : i32, i32
  }
  func.func @transform_1(%arg0: i32) -> (i32, i32) {
    %c0_i32 = arith.constant 0 : i32
    %c0_i32_0 = arith.constant 0 : i32
    %c0_i32_1 = arith.constant 0 : i32
    return %c0_i32, %c0_i32_0 : i32, i32
  }
  func.func @transform_2(%arg0: i32) -> (i32, i32) {
    %c0_i32 = arith.constant 0 : i32
    %c0_i32_0 = arith.constant 0 : i32
    %c0_i32_1 = arith.constant 0 : i32
    return %c0_i32, %c0_i32_0 : i32, i32
  }
  func.func @transform_3(%arg0: i32) -> (i32, i32) {
    %c0_i32 = arith.constant 0 : i32
    %c0_i32_0 = arith.constant 0 : i32
    %c0_i32_1 = arith.constant 0 : i32
    return %c0_i32, %c0_i32_0 : i32, i32
  }
  func.func @transform_4(%arg0: i32) -> (i32, i32) {
    %c0_i32 = arith.constant 0 : i32
    %c0_i32_0 = arith.constant 0 : i32
    %c0_i32_1 = arith.constant 0 : i32
    return %c0_i32, %c0_i32_0 : i32, i32
  }
  func.func @transform_5(%arg0: i32) -> (i32, i32) {
    %c0_i32 = arith.constant 0 : i32
    %c0_i32_0 = arith.constant 0 : i32
    %c0_i32_1 = arith.constant 0 : i32
    return %c0_i32, %c0_i32_0 : i32, i32
  }
  func.func @transform_6(%arg0: i32) -> (i32, i32) {
    %c0_i32 = arith.constant 0 : i32
    %c0_i32_0 = arith.constant 0 : i32
    %c0_i32_1 = arith.constant 0 : i32
    return %c0_i32, %c0_i32_0 : i32, i32
  }
  func.func @transform_7(%arg0: i32) -> (i32, i32) {
    %c0_i32 = arith.constant 0 : i32
    %c0_i32_0 = arith.constant 0 : i32
    %c0_i32_1 = arith.constant 0 : i32
    return %c0_i32, %c0_i32_0 : i32, i32
  }
  func.func @transform_8(%arg0: i32) -> (i32, i32) {
    %c0_i32 = arith.constant 0 : i32
    %c0_i32_0 = arith.constant 0 : i32
    %c0_i32_1 = arith.constant 0 : i32
    return %c0_i32, %c0_i32_0 : i32, i32
  }
  func.func @transform_9(%arg0: i32) -> (i32, i32, i32) {
    %c0_i32 = arith.constant 0 : i32
    %c0_i32_0 = arith.constant 0 : i32
    %c0_i32_1 = arith.constant 0 : i32
    return %arg0, %c0_i32, %c0_i32_0 : i32, i32, i32
  }
}

</mosaic_0001>

<llo_original>
// kernel: tpu_custom_call.1
$region0: #{tpu_custom_call.1}
  #allocation0 [shape = 'u32[]', space=smem, size = 0x4, offset = 0x4, fixed_abs, tag = 'smem constant byte address 0x4 - core index']
  #allocation1 [shape = 'u32[144,128]{1,0:T(1,128)}', space=vmem, size = 0x12000, scoped, tag = 'internal scratch']
  #allocation2 [shape = 'f32[1,1]{1,0:T(1,128)S(1)}', space=vmem, size = 0x200, scoped, tag = 'scoped memory for tpu_custom_call.1']
  %s0 = inlined_call_operand.vmem [shape: bf16[16,32], index: 0, kind: input, shape index: {}]
  %s1 = inlined_call_operand.vmem [shape: bf16[32,64], index: 1, kind: input, shape index: {}]
  %s2 = inlined_call_operand.vmem [shape: f32[1,64], index: 2, kind: input, shape index: {}]
  %s3 = inlined_call_operand.vmem [shape: f32[64,32], index: 3, kind: input, shape index: {}]
  %s4 = inlined_call_operand.vmem [shape: f32[1,32], index: 4, kind: input, shape index: {}]
  %s5 = inlined_call_operand.vmem [shape: f32[32,16], index: 5, kind: input, shape index: {}]
  %s6 = inlined_call_operand.vmem [shape: f32[1,16], index: 6, kind: input, shape index: {}]
  %s7 = inlined_call_operand.vmem [shape: f32[1,16], index: 7, kind: input, shape index: {}]
  %s8 = inlined_call_operand.<no memory space> [shape: f32[1,1], index: 8, kind: input, shape index: {}]
  %s9 = inlined_call_operand.hbm [shape: f32[1,1,16], index: 9, kind: output, shape index: {}]
  %s10 = sld [smem:[#allocation0]]
  $region46: #{tpu_custom_call.1} parent=0
    _
  %s12 = ssub.s32 1, %s10
  %s13 = scalar_select 0, %s12, %s10
  %v14 = vstv %s8
  %15 = vst [vmem:[#allocation2] sm:$0x1] %v14
  $region1: #{tpu_custom_call.1} parent=0
    #allocation3 [shape = 'u8[512]{0}', space=vmem, size = 0x400, scoped, tag = 'output window, operand 0, single buffered']
    #allocation4 [shape = 's32[1]{0}', space=sflag, size = 0x4, scoped, tag = 'scoped memory for tpu_custom_call.1']
    %16 = vsyncpa [#allocation4], 0
    // Predicated region
    $region2: #{tpu_custom_call.1} parent=1 // pred_check
      _
    $region3: #{tpu_custom_call.1} parent=1 // pred_check_branch
      %18 = sbr.rel (0) target = $region5
    $region4: #{tpu_custom_call.1} parent=1 // pred_region
      _
    $region5: #{tpu_custom_call.1} parent=1 // pred_fallthru
      _
    // Predicated region
    $region6: #{tpu_custom_call.1} parent=1 // pred_check
      _
    $region7: #{tpu_custom_call.1} parent=1 // pred_check_branch
      %20 = sbr.rel (0) target = $region9
    $region8: #{tpu_custom_call.1} parent=1 // pred_region
      _
    $region9: #{tpu_custom_call.1} parent=1 // pred_fallthru
      _
    // Predicated region
    $region10: #{tpu_custom_call.1} parent=1 // pred_check
      _
    $region11: #{tpu_custom_call.1} parent=1 // pred_check_branch
      %22 = sbr.rel (0) target = $region13
    $region12: #{tpu_custom_call.1} parent=1 // pred_region
      _
    $region13: #{tpu_custom_call.1} parent=1 // pred_fallthru
      _
    // Predicated region
    $region14: #{tpu_custom_call.1} parent=1 // pred_check
      _
    $region15: #{tpu_custom_call.1} parent=1 // pred_check_branch
      %24 = sbr.rel (0) target = $region17
    $region16: #{tpu_custom_call.1} parent=1 // pred_region
      _
    $region17: #{tpu_custom_call.1} parent=1 // pred_fallthru
      _
    // Predicated region
    $region18: #{tpu_custom_call.1} parent=1 // pred_check
      _
    $region19: #{tpu_custom_call.1} parent=1 // pred_check_branch
      %26 = sbr.rel (0) target = $region21
    $region20: #{tpu_custom_call.1} parent=1 // pred_region
      _
    $region21: #{tpu_custom_call.1} parent=1 // pred_fallthru
      _
    // Predicated region
    $region22: #{tpu_custom_call.1} parent=1 // pred_check
      _
    $region23: #{tpu_custom_call.1} parent=1 // pred_check_branch
      %28 = sbr.rel (0) target = $region25
    $region24: #{tpu_custom_call.1} parent=1 // pred_region
      _
    $region25: #{tpu_custom_call.1} parent=1 // pred_fallthru
      _
    // Predicated region
    $region26: #{tpu_custom_call.1} parent=1 // pred_check
      _
    $region27: #{tpu_custom_call.1} parent=1 // pred_check_branch
      %30 = sbr.rel (0) target = $region29
    $region28: #{tpu_custom_call.1} parent=1 // pred_region
      _
    $region29: #{tpu_custom_call.1} parent=1 // pred_fallthru
      _
    // Predicated region
    $region30: #{tpu_custom_call.1} parent=1 // pred_check
      _
    $region31: #{tpu_custom_call.1} parent=1 // pred_check_branch
      %32 = sbr.rel (0) target = $region33
    $region32: #{tpu_custom_call.1} parent=1 // pred_region
      _
    $region33: #{tpu_custom_call.1} parent=1 // pred_fallthru
      _
    // Predicated region
    $region34: #{tpu_custom_call.1} parent=1 // pred_check
      _
    $region35: #{tpu_custom_call.1} parent=1 // pred_check_branch
      %34 = sbr.rel (0) target = $region37
    $region36: #{tpu_custom_call.1} parent=1 // pred_region
      _
    $region37: #{tpu_custom_call.1} parent=1 // pred_fallthru
      _
    %v36 = vld [vmem:[%s0] sm:$0xf]
    %v37 = vld [vmem:[%s0 + $0x4] sm:$0xf]
    %v38 = vld [vmem:[%s1] sm:$0xf]
    %v39 = vld [vmem:[%s1 + $0x4] sm:$0xf]
    %v40 = vld [vmem:[%s1 + $0x8] sm:$0xf]
    %v41 = vld [vmem:[%s1 + $0xc] sm:$0xf]
    %v42 = vld [vmem:[%s2] sm:$0x1]
    %v44 = vlaneseq
    %v45 = vshrl.u32 %v44, 7
    %v46 = vsub.s32 0, %v45
    %v47 = vrot.slane %v42, %v46
    %v51 = vunpack.c.l.b16 %v36
    %v52 = vunpack.c.l.b16 %v37
    %v53 = vpack.c.b16 %v52, %v51
    %v58 = vunpack.c.l.b16 %v38
    %v59 = vunpack.c.l.b16 %v39
    %v60 = vunpack.c.l.b16 %v40
    %v61 = vunpack.c.l.b16 %v41
    %v62 = vpack.c.b16 %v59, %v58
    %v63 = vpack.c.b16 %v61, %v60
    %vm66 = vcmask 261120
    %v68 = vsel %vm66, %v53, 0
    %70 = vmatprep.subr.bf16.mxu0 0
    %71 = vmatpush1.bf16.msra.mxu0 %v62
    %72 = vmatprep.subr.bf16.mxu0 0
    %73 = vmatpush1.bf16.msra.mxu0 %v63
    %74 = vmatprep.subr.bf16.mxu0 0
    %75 = vmatpush1.bf16.msra.mxu0 0
    %76 = vmatprep.subr.bf16.mxu0 0
    %77 = vmatpush1.bf16.msra.mxu0 0
    %78 = vmatprep.subr.bf16.mxu0 0
    %79 = vmatpush1.bf16.msra.mxu0 0
    %80 = vmatprep.subr.bf16.mxu0 0
    %81 = vmatpush1.bf16.msra.mxu0 0
    %82 = vmatprep.subr.bf16.mxu0 0
    %83 = vmatpush1.bf16.msra.mxu0 0
    %84 = vmatprep.subr.bf16.mxu0 0
    %85 = vmatpush1.bf16.msra.mxu0 0
    %86 = vmatprep.subr.bf16.mxu0 0
    %87 = vmatpush1.bf16.msra.mxu0 0
    %88 = vmatprep.subr.bf16.mxu0 0
    %89 = vmatpush1.bf16.msra.mxu0 0
    %90 = vmatprep.subr.bf16.mxu0 0
    %91 = vmatpush1.bf16.msra.mxu0 0
    %92 = vmatprep.subr.bf16.mxu0 0
    %93 = vmatpush1.bf16.msra.mxu0 0
    %94 = vmatprep.subr.bf16.mxu0 0
    %95 = vmatpush1.bf16.msra.mxu0 0
    %96 = vmatprep.subr.bf16.mxu0 0
    %97 = vmatpush1.bf16.msra.mxu0 0
    %98 = vmatprep.subr.bf16.mxu0 0
    %99 = vmatpush1.bf16.msra.mxu0 0
    %100 = vmatprep.subr.bf16.mxu0 0
    %101 = vmatpush1.bf16.msra.mxu0 0
    %102 = vmatprep.mubr.bf16.mxu0 0
    %103 = vmatmul.mubr.bf16.gmra.mrb[0].mxu0 %v68
    %v104 = vpop.f32.mrb[0].mxu0
    %v105 = vadd.f32 %v47, %v104
    %v106 = vpop.f32.mrb[0].mxu0
    %v107 = vpop.f32.mrb[0].mxu0
    %v108 = vadd.f32 %v47, %v107
    %v109 = vpop.f32.mrb[0].mxu0
    %110 = vdwg.mxu0
    %v111 = vmax.f32 %v105, 0.0
    %v112 = vmax.f32 %v108, 0.0
    %v113 = vld [vmem:[%s3] sm:$0xff]
    %v114 = vld [vmem:[%s3 + $0x8] sm:$0xff]
    %v115 = vld [vmem:[%s3 + $0x10] sm:$0xff]
    %v116 = vld [vmem:[%s3 + $0x18] sm:$0xff]
    %v117 = vld [vmem:[%s3 + $0x20] sm:$0xff]
    %v118 = vld [vmem:[%s3 + $0x28] sm:$0xff]
    %v119 = vld [vmem:[%s3 + $0x30] sm:$0xff]
    %v120 = vld [vmem:[%s3 + $0x38] sm:$0xff]
    %v121 = vld [vmem:[%s4] sm:$0x1]
    %v123 = vlaneseq
    %v124 = vshrl.u32 %v123, 7
    %v125 = vsub.s32 0, %v124
    %v126 = vrot.slane %v121, %v125
    %vm128 = vcmask 523264
    %v130 = vsel %vm128, %v111, 0
    %v133 = vsel %vm128, %v112, 0
    %135 = vmatprep.subr.mxu0 0.0
    %136 = vmatpush1.msra.mxu0 %v113
    %137 = vmatprep.subr.mxu0 0.0
    %138 = vmatpush1.msra.mxu0 %v114
    %139 = vmatprep.subr.mxu0 0.0
    %140 = vmatpush1.msra.mxu0 %v115
    %141 = vmatprep.subr.mxu0 0.0
    %142 = vmatpush1.msra.mxu0 %v116
    %143 = vmatprep.subr.mxu0 0.0
    %144 = vmatpush1.msra.mxu0 %v117
    %145 = vmatprep.subr.mxu0 0.0
    %146 = vmatpush1.msra.mxu0 %v118
    %147 = vmatprep.subr.mxu0 0.0
    %148 = vmatpush1.msra.mxu0 %v119
    %149 = vmatprep.subr.mxu0 0.0
    %150 = vmatpush1.msra.mxu0 %v120
    %151 = vmatprep.subr.mxu0 0.0
    %152 = vmatpush1.msra.mxu0 0.0
    %153 = vmatprep.subr.mxu0 0.0
    %154 = vmatpush1.msra.mxu0 0.0
    %155 = vmatprep.subr.mxu0 0.0
    %156 = vmatpush1.msra.mxu0 0.0
    %157 = vmatprep.subr.mxu0 0.0
    %158 = vmatpush1.msra.mxu0 0.0
    %159 = vmatprep.subr.mxu0 0.0
    %160 = vmatpush1.msra.mxu0 0.0
    %161 = vmatprep.subr.mxu0 0.0
    %162 = vmatpush1.msra.mxu0 0.0
    %163 = vmatprep.subr.mxu0 0.0
    %164 = vmatpush1.msra.mxu0 0.0
    %165 = vmatprep.subr.mxu0 0.0
    %166 = vmatpush1.msra.mxu0 0.0
    %167 = vmatprep.subr.mxu0 0.0
    %168 = vmatpush1.msra.mxu0 0.0
    %169 = vmatprep.subr.mxu0 0.0
    %170 = vmatpush1.msra.mxu0 0.0
    %171 = vmatprep.subr.mxu0 0.0
    %172 = vmatpush1.msra.mxu0 0.0
    %173 = vmatprep.subr.mxu0 0.0
    %174 = vmatpush1.msra.mxu0 0.0
    %175 = vmatprep.subr.mxu0 0.0
    %176 = vmatpush1.msra.mxu0 0.0
    %177 = vmatprep.subr.mxu0 0.0
    %178 = vmatpush1.msra.mxu0 0.0
    %179 = vmatprep.subr.mxu0 0.0
    %180 = vmatpush1.msra.mxu0 0.0
    %181 = vmatprep.subr.mxu0 0.0
    %182 = vmatpush1.msra.mxu0 0.0
    %183 = vmatprep.subr.mxu0 0.0
    %184 = vmatpush1.msra.mxu0 0.0
    %185 = vmatprep.subr.mxu0 0.0
    %186 = vmatpush1.msra.mxu0 0.0
    %187 = vmatprep.subr.mxu0 0.0
    %188 = vmatpush1.msra.mxu0 0.0
    %189 = vmatprep.subr.mxu0 0.0
    %190 = vmatpush1.msra.mxu0 0.0
    %191 = vmatprep.subr.mxu0 0.0
    %192 = vmatpush1.msra.mxu0 0.0
    %193 = vmatprep.subr.mxu0 0.0
    %194 = vmatpush1.msra.mxu0 0.0
    %195 = vmatprep.subr.mxu0 0.0
    %196 = vmatpush1.msra.mxu0 0.0
    %197 = vmatprep.subr.mxu0 0.0
    %198 = vmatpush1.msra.mxu0 0.0
    %199 = vmatprep.mubr.f32.mxu0 0.0
    %200 = vmatmul.mubr.f32.gmra.mrb[0].mxu0 %v130
    %v201 = vpop.f32.mrb[0].mxu0
    %v202 = vadd.f32 %v126, %v201
    %v203 = vpop.f32.mrb[0].mxu0
    %204 = vmatprep.mubr.f32.mxu0 0.0
    %205 = vmatmul.mubr.f32.gmra.mrb[0].mxu0 %v133
    %v206 = vpop.f32.mrb[0].mxu0
    %v207 = vadd.f32 %v126, %v206
    %v208 = vpop.f32.mrb[0].mxu0
    %209 = vdwg.mxu0
    %v210 = vmax.f32 %v202, 0.0
    %v211 = vmax.f32 %v207, 0.0
    %v212 = vld [vmem:[%s5] sm:$0xff]
    %v213 = vld [vmem:[%s5 + $0x8] sm:$0xff]
    %v214 = vld [vmem:[%s5 + $0x10] sm:$0xff]
    %v215 = vld [vmem:[%s5 + $0x18] sm:$0xff]
    %v216 = vld [vmem:[%s6] sm:$0x1]
    %v218 = vlaneseq
    %v219 = vshrl.u32 %v218, 7
    %v220 = vsub.s32 0, %v219
    %v221 = vrot.slane %v216, %v220
    %v224 = vsel %vm66, %v210, 0
    %v227 = vsel %vm66, %v211, 0
    %229 = vmatprep.subr.mxu0 0.0
    %230 = vmatpush1.msra.mxu0 %v212
    %231 = vmatprep.subr.mxu0 0.0
    %232 = vmatpush1.msra.mxu0 %v213
    %233 = vmatprep.subr.mxu0 0.0
    %234 = vmatpush1.msra.mxu0 %v214
    %235 = vmatprep.subr.mxu0 0.0
    %236 = vmatpush1.msra.mxu0 %v215
    %237 = vmatprep.subr.mxu0 0.0
    %238 = vmatpush1.msra.mxu0 0.0
    %239 = vmatprep.subr.mxu0 0.0
    %240 = vmatpush1.msra.mxu0 0.0
    %241 = vmatprep.subr.mxu0 0.0
    %242 = vmatpush1.msra.mxu0 0.0
    %243 = vmatprep.subr.mxu0 0.0
    %244 = vmatpush1.msra.mxu0 0.0
    %245 = vmatprep.subr.mxu0 0.0
    %246 = vmatpush1.msra.mxu0 0.0
    %247 = vmatprep.subr.mxu0 0.0
    %248 = vmatpush1.msra.mxu0 0.0
    %249 = vmatprep.subr.mxu0 0.0
    %250 = vmatpush1.msra.mxu0 0.0
    %251 = vmatprep.subr.mxu0 0.0
    %252 = vmatpush1.msra.mxu0 0.0
    %253 = vmatprep.subr.mxu0 0.0
    %254 = vmatpush1.msra.mxu0 0.0
    %255 = vmatprep.subr.mxu0 0.0
    %256 = vmatpush1.msra.mxu0 0.0
    %257 = vmatprep.subr.mxu0 0.0
    %258 = vmatpush1.msra.mxu0 0.0
    %259 = vmatprep.subr.mxu0 0.0
    %260 = vmatpush1.msra.mxu0 0.0
    %261 = vmatprep.subr.mxu0 0.0
    %262 = vmatpush1.msra.mxu0 0.0
    %263 = vmatprep.subr.mxu0 0.0
    %264 = vmatpush1.msra.mxu0 0.0
    %265 = vmatprep.subr.mxu0 0.0
    %266 = vmatpush1.msra.mxu0 0.0
    %267 = vmatprep.subr.mxu0 0.0
    %268 = vmatpush1.msra.mxu0 0.0
    %269 = vmatprep.subr.mxu0 0.0
    %270 = vmatpush1.msra.mxu0 0.0
    %271 = vmatprep.subr.mxu0 0.0
    %272 = vmatpush1.msra.mxu0 0.0
    %273 = vmatprep.subr.mxu0 0.0
    %274 = vmatpush1.msra.mxu0 0.0
    %275 = vmatprep.subr.mxu0 0.0
    %276 = vmatpush1.msra.mxu0 0.0
    %277 = vmatprep.subr.mxu0 0.0
    %278 = vmatpush1.msra.mxu0 0.0
    %279 = vmatprep.subr.mxu0 0.0
    %280 = vmatpush1.msra.mxu0 0.0
    %281 = vmatprep.subr.mxu0 0.0
    %282 = vmatpush1.msra.mxu0 0.0
    %283 = vmatprep.subr.mxu0 0.0
    %284 = vmatpush1.msra.mxu0 0.0
    %285 = vmatprep.subr.mxu0 0.0
    %286 = vmatpush1.msra.mxu0 0.0
    %287 = vmatprep.subr.mxu0 0.0
    %288 = vmatpush1.msra.mxu0 0.0
    %289 = vmatprep.subr.mxu0 0.0
    %290 = vmatpush1.msra.mxu0 0.0
    %291 = vmatprep.subr.mxu0 0.0
    %292 = vmatpush1.msra.mxu0 0.0
    %293 = vmatprep.mubr.f32.mxu0 0.0
    %294 = vmatmul.mubr.f32.gmra.mrb[0].mxu0 %v224
    %v295 = vpop.f32.mrb[0].mxu0
    %v296 = vadd.f32 %v221, %v295
    %v297 = vpop.f32.mrb[0].mxu0
    %298 = vmatprep.mubr.f32.mxu0 0.0
    %299 = vmatmul.mubr.f32.gmra.mrb[0].mxu0 %v227
    %v300 = vpop.f32.mrb[0].mxu0
    %v301 = vadd.f32 %v221, %v300
    %v302 = vpop.f32.mrb[0].mxu0
    %303 = vdwg.mxu0
    %v304 = vmax.f32 %v296, 0.0
    %v305 = vmax.f32 %v301, 0.0
    %v306 = vld [vmem:[%s7] sm:$0x1]
    %v308 = vlaneseq
    %v309 = vshrl.u32 %v308, 7
    %v310 = vsub.s32 0, %v309
    %v311 = vrot.slane %v306, %v310
    %v313 = vmul.f32 %v304, %v311
    %v314 = vmul.f32 %v305, %v311
    %vm315 = vcmask 130048
    %v316 = vsel %vm315, %v313, 0.0
    %317 = vadd.xlane.f32.xlu0 %v316
    %v318 = vpop.xlane.xlu0 %317
    %v319 = vsel %vm315, %v314, 0.0
    %320 = vadd.xlane.f32.xlu0 %v319
    %v321 = vpop.xlane.xlu0 %320
    %v322 = vld [vmem:[#allocation2] sm:$0x1]
    %v324 = vlaneseq
    %v325 = vshrl.u32 %v324, 7
    %v326 = vsub.s32 0, %v325
    %v327 = vrot.slane %v322, %v326
    %v329 = vadd.f32 %v318, %v327
    %v330 = vadd.f32 %v321, %v327
    %333 = vset.pattern.permute.xlu0 0
    %334 = vperm.xlu0 %333, %v329
    %v335 = vpop.permute.xlu0 %334
    %336 = vset.pattern.permute.xlu0 0
    %337 = vperm.xlu0 %336, %v330
    %v338 = vpop.permute.xlu0 %337
    %v339 = vlaneseq
    %v340 = vand.u32 %v339, 127
    %v341 = vlaneseq
    %v342 = vshrl.u32 %v341, 7
    %v343 = vsub.s32 %v340, %v342
    %v344 = vrot.slane %v335, %v343
    %v345 = vadd.s32 %v340, 4294967288
    %v346 = vlaneseq
    %v347 = vshrl.u32 %v346, 7
    %v348 = vsub.s32 %v345, %v347
    %v349 = vrot.slane %v338, %v348
    %vm350 = vcmask 130112
    %v351 = vsel %vm350, %v349, %v344
    %vm353 = vcmask 122880
    %354 = vst.msk [vmem:[#allocation3] sm:$0x1] %vm353, %v351
    // Predicated region
    $region38: #{tpu_custom_call.1} parent=1 // pred_check
      _
    $region39: #{tpu_custom_call.1} parent=1 // pred_check_branch
      %356 = sbr.rel (0) target = $region41
    $region40: #{tpu_custom_call.1} parent=1 // pred_region
      %s358 = ssub.s32 16, 16
      %359 = vsyncadd [#allocation4], %s358
      %s361 = sshll.u32 [#allocation3], 4
      %s362 = int_to_ptr.vmem [resolvable:$true] %s361
      %364 = dma.vmem_to_hbm [thread:$0]  %s362, 16, %s9, [#allocation4]
    $region41: #{tpu_custom_call.1} parent=1 // pred_fallthru
      _
    // Predicated region
    $region42: #{tpu_custom_call.1} parent=1 // pred_check
      _
    $region43: #{tpu_custom_call.1} parent=1 // pred_check_branch
      %366 = sbr.rel (0) target = $region45
    $region44: #{tpu_custom_call.1} parent=1 // pred_region
      %367 = dma.done [#allocation4], 16
    $region45: #{tpu_custom_call.1} parent=1 // pred_fallthru
      _
    %368 = vsyncpa [#allocation4], 1

</llo_original>
